<compile_context>
chip_gen: v6e
topology: v6e:2x2x1
jax: 0.10.0
libtpu: 0.0.40
codegen_flags: <defaults>
</compile_context>

<pallas_src>
import math
from functools import partial

import jax
import jax.numpy as jnp
from jax.experimental import pallas as pl
from jax.experimental.pallas import tpu as pltpu

_TARGET_BLOCK_BYTES = 8 * 1024 * 1024        # ~8 MiB per block
_VMEM_LIMIT_BYTES = 40 * 1024 * 1024         # explicit scoped-VMEM budget
_MULTISTEP_THRESHOLD_BYTES = 2 * 1024 * 1024 # force multi-step grid above this
_MIN_STEPS = 4                               # steps once above the threshold


def _flat_copy_kernel(x_ref, o_ref):
    # Both sides share the same flat, lane-dense layout: one full, unmasked
    # block copy per grid step.
    o_ref[...] = x_ref[...]


def _sublane_align(itemsize):
    """Native second-minor tile extent: f32 -> 8, bf16 -> 16, int8/fp8 -> 32."""
    return max(8, 8 * (4 // max(1, int(itemsize))))


def _pick_cols(total):
    """Widest lane-dense (multiple-of-128) column count that divides total."""
    for c in (2048, 1024, 512, 256, 128):
        if total % c == 0:
            return c
    return None


def _pick_row_block(rows, cols, itemsize, align):
    """Largest row block that divides `rows`, is a multiple of the dtype-aware
    sublane alignment (or equals the full extent), stays near the per-block
    byte target, and leaves >= _MIN_STEPS grid steps for large copies."""
    total_bytes = rows * cols * itemsize
    cap = max(align, _TARGET_BLOCK_BYTES // max(1, cols * itemsize))
    if total_bytes > _MULTISTEP_THRESHOLD_BYTES:
        # Multi-step grid -> both v7x TensorCores engage + DMA in/out overlap.
        cap = min(cap, max(align, rows // _MIN_STEPS))
    cap = min(cap, rows)
    if rows <= align:
        return rows                       # full extent -> always layout-legal
    for rb in range(cap, align - 1, -1):
        if rows % rb == 0 and rb % align == 0:
            return rb
    return rows                           # fallback: one full-extent block


def _copy_call(rows, cols, row_block, dtype, alias):
    itemsize = jnp.dtype(dtype).itemsize
    return pl.pallas_call(
        _flat_copy_kernel,
        out_shape=jax.ShapeDtypeStruct((rows, cols), dtype),
        grid=(rows // row_block,),
        in_specs=[pl.BlockSpec((row_block, cols), lambda i: (i, 0))],
        out_specs=pl.BlockSpec((row_block, cols), lambda i: (i, 0)),
        compiler_params=pltpu.CompilerParams(
            dimension_semantics=("parallel",),
            vmem_limit_bytes=_VMEM_LIMIT_BYTES),
        cost_estimate=pl.CostEstimate(
            flops=0, transcendentals=0,
            bytes_accessed=2 * rows * cols * itemsize),
        input_output_aliases={0: 0} if alias else {},
    )


@partial(jax.jit, static_argnums=(1,), donate_argnums=(0,))
def _copy_2d_donated(y2, row_block):
    rows, cols = y2.shape
    return _copy_call(rows, cols, row_block, y2.dtype, alias=True)(y2)


@partial(jax.jit, static_argnums=(1,))
def _copy_2d(y2, row_block):
    rows, cols = y2.shape
    return _copy_call(rows, cols, row_block, y2.dtype, alias=False)(y2)


def flatten(x):
    """Pallas implementation of torch Flatten: (B, ...) -> (B, prod(rest))."""
    B = x.shape[0]
    feat = math.prod(x.shape[1:]) if x.ndim > 1 else 1
    total = B * feat
    itemsize = jnp.dtype(x.dtype).itemsize
    align = _sublane_align(itemsize)

    cols = _pick_cols(total)
    if cols is not None:
        rows, cols2 = total // cols, cols
    else:
        # Odd flattened length: tile along the batch/row axis; the lane dim
        # equals the full feature extent so the block layout stays legal.
        rows, cols2 = B, feat

    row_block = _pick_row_block(rows, cols2, itemsize, align)

    # Metadata-only relayout: identical contents to torch's x.view(B, -1) on a
    # contiguous row-major tensor, presented as a lane-dense 2D slab.
    y2 = jnp.reshape(x, (rows, cols2))

    # Only donate (and alias input->output) when the reshape produced a fresh
    # intermediate buffer; a no-op reshape returns the caller's array itself.
    if y2 is x:
        out2 = _copy_2d(y2, row_block)
    else:
        out2 = _copy_2d_donated(y2, row_block)
    return jnp.reshape(out2, (B, feat))


if __name__ == "__main__":
    key = jax.random.PRNGKey(0)
    k1, k2, k3, k4 = jax.random.split(key, 4)

    # Primary test: small NCHW tensor (lane-dense main path, single step).
    B, C, H, W = 2, 4, 16, 16
    x = jax.random.normal(k1, (B, C, H, W), dtype=jnp.float32)
    out = jax.block_until_ready(flatten(x))
    ref = jnp.reshape(x, (B, -1))
    assert out.shape == (B, C * H * W)
    assert out.dtype == x.dtype
    assert bool(jnp.array_equal(out, ref))

    # Awkward ShuffleNet-like spatial size (tiled odd-shape fallback path).
    x2 = jax.random.normal(k2, (2, 3, 7, 7), dtype=jnp.float32)
    out2 = jax.block_until_ready(flatten(x2))
    ref2 = jnp.reshape(x2, (2, -1))
    assert out2.shape == ref2.shape
    assert bool(jnp.array_equal(out2, ref2))

    # Larger tensor (> 2 MiB) to exercise the guaranteed multi-step grid.
    x3 = jax.random.normal(k3, (16, 64, 32, 32), dtype=jnp.float32)
    out3 = jax.block_until_ready(flatten(x3))
    ref3 = jnp.reshape(x3, (16, -1))
    assert bool(jnp.array_equal(out3, ref3))

    # bf16 input to exercise the dtype-aware sublane alignment.
    x4 = jax.random.normal(k4, (4, 32, 16, 16), dtype=jnp.bfloat16)
    out4 = jax.block_until_ready(flatten(x4))
    ref4 = jnp.reshape(x4, (4, -1))
    assert out4.dtype == jnp.bfloat16
    assert bool(jnp.array_equal(out4, ref4))

    print("KERNEL_OK")
</pallas_src>

<mosaic_0001>
module attributes {stable_mosaic.version = 11 : i64} {
  func.func @_flat_copy_kernel(%arg0: i32, %arg1: memref<1x2048xf32, #tpu.memory_space<vmem>>, %arg2: memref<1x2048xf32, #tpu.memory_space<vmem>>) attributes {dimension_semantics = [#tpu.dimension_semantics<parallel>], iteration_bounds = array<i64: 1>, scalar_prefetch = 0 : i64, scratch_operands = 0 : i64, tpu.core_type = #tpu.core_type<tc>, window_params = [{transform_indices = @transform_0, window_bounds = array<i64: 1, 2048>}, {transform_indices = @transform_1, window_bounds = array<i64: 1, 2048>}]} {
    %c0 = arith.constant 0 : index
    %c0_0 = arith.constant 0 : index
    %0 = vector.load %arg1[%c0, %c0_0] : memref<1x2048xf32, #tpu.memory_space<vmem>>, vector<1x2048xf32>
    %c0_1 = arith.constant 0 : index
    %c0_2 = arith.constant 0 : index
    %1 = vector.load %arg2[%c0_1, %c0_2] : memref<1x2048xf32, #tpu.memory_space<vmem>>, vector<1x2048xf32>
    tpu.vector_store %arg2[%c0_1, %c0_2], %0 {strides = array<i32>} : memref<1x2048xf32, #tpu.memory_space<vmem>>, vector<1x2048xf32>,
    return
  }
  func.func @transform_0(%arg0: i32) -> (i32, i32) {
    %c0_i32 = arith.constant 0 : i32
    %c0_i32_0 = arith.constant 0 : i32
    return %arg0, %c0_i32 : i32, i32
  }
  func.func @transform_1(%arg0: i32) -> (i32, i32) {
    %c0_i32 = arith.constant 0 : i32
    %c0_i32_0 = arith.constant 0 : i32
    return %arg0, %c0_i32 : i32, i32
  }
}

</mosaic_0001>

<llo_original>
// kernel: _copy_2d_donated.1
$region0: #{_copy_2d_donated.1}
  #allocation0 [shape = 'u32[]', space=smem, size = 0x4, offset = 0x4, fixed_abs, tag = 'smem constant byte address 0x4 - core index']
  #allocation1 [shape = 'u32[144,128]{1,0:T(1,128)}', space=vmem, size = 0x12000, scoped, tag = 'internal scratch']
  %s0 = inlined_call_operand.hbm [shape: f32[1,2048], index: 0, kind: input, shape index: {}, may-alias: {0,1}]
  %s1 = inlined_call_operand.hbm [shape: f32[1,2048], index: 1, kind: output, shape index: {}, may-alias: {0,1}]
  %s2 = sld [smem:[#allocation0]]
  $region18: #{_copy_2d_donated.1} parent=0
    _
  %s4 = ssub.s32 1, %s2
  %s5 = scalar_select 0, %s4, %s2
  $region1: #{_copy_2d_donated.1} parent=0
    #allocation2 [shape = 'u8[8192]{0}', space=vmem, size = 0x2000, scoped, tag = 'input window, operand 0, single buffered']
    #allocation3 [shape = 's32[1]{0}', space=sflag, size = 0x4, scoped, tag = 'scoped memory for _copy_2d_donated.1']
    #allocation4 [shape = 's32[1]{0}', space=sflag, size = 0x4, scoped, tag = 'scoped memory for _copy_2d_donated.1']
    #allocation5 [shape = 'u8[8192]{0}', space=vmem, size = 0x2000, scoped, tag = 'output window, operand 0, single buffered']
    %6 = vsyncpa [#allocation3], 0
    %7 = vsyncpa [#allocation4], 0
    // Predicated region
    $region2: #{_copy_2d_donated.1} parent=1 // pred_check
      _
    $region3: #{_copy_2d_donated.1} parent=1 // pred_check_branch
      %9 = sbr.rel (0) target = $region5
    $region4: #{_copy_2d_donated.1} parent=1 // pred_region
      %s11 = ssub.s32 256, 256
      %12 = vsyncadd [#allocation3], %s11
      %s14 = sshll.u32 [#allocation2], 4
      %s15 = int_to_ptr.vmem [resolvable:$true] %s14
      %17 = dma.hbm_to_vmem [thread:$0]  %s0, 256, %s15, [#allocation3]
    $region5: #{_copy_2d_donated.1} parent=1 // pred_fallthru
      _
    // Predicated region
    $region6: #{_copy_2d_donated.1} parent=1 // pred_check
      _
    $region7: #{_copy_2d_donated.1} parent=1 // pred_check_branch
      %19 = sbr.rel (0) target = $region9
    $region8: #{_copy_2d_donated.1} parent=1 // pred_region
      %20 = dma.done [#allocation3], 256
    $region9: #{_copy_2d_donated.1} parent=1 // pred_fallthru
      _
    %v21 = vld [vmem:[#allocation2] sm:$0xff]
    %v22 = vld [vmem:[#allocation2 + $0x8] sm:$0xff]
    %23 = vst [vmem:[#allocation5] sm:$0xff] %v21
    %24 = vst [vmem:[#allocation5 + $0x8] sm:$0xff] %v22
    // Predicated region
    $region10: #{_copy_2d_donated.1} parent=1 // pred_check
      _
    $region11: #{_copy_2d_donated.1} parent=1 // pred_check_branch
      %26 = sbr.rel (0) target = $region13
    $region12: #{_copy_2d_donated.1} parent=1 // pred_region
      %s28 = ssub.s32 256, 256
      %29 = vsyncadd [#allocation4], %s28
      %s31 = sshll.u32 [#allocation5], 4
      %s32 = int_to_ptr.vmem [resolvable:$true] %s31
      %34 = dma.vmem_to_hbm [thread:$0]  %s32, 256, %s1, [#allocation4]
    $region13: #{_copy_2d_donated.1} parent=1 // pred_fallthru
      _
    // Predicated region
    $region14: #{_copy_2d_donated.1} parent=1 // pred_check
      _
    $region15: #{_copy_2d_donated.1} parent=1 // pred_check_branch
      %36 = sbr.rel (0) target = $region17
    $region16: #{_copy_2d_donated.1} parent=1 // pred_region
      %37 = dma.done [#allocation4], 256
    $region17: #{_copy_2d_donated.1} parent=1 // pred_fallthru
      _
    %38 = vsyncpa [#allocation3], 1
    %39 = vsyncpa [#allocation4], 1

</llo_original>
